<compile_context>
chip_gen: v7x
topology: tpu7x:2x2x1
jax: 0.10.0
libtpu: 0.0.40
codegen_flags: <defaults>
</compile_context>

<pallas_src>
import numpy as np
import jax
import jax.numpy as jnp
from jax import lax
from jax.experimental import pallas as pl
from jax.experimental.pallas import tpu as pltpu


def _bilinear_matrix(in_size: int, out_size: int) -> np.ndarray:
    """PyTorch nn.Upsample(mode='bilinear', align_corners=False) as an (out,in) matrix."""
    o = np.arange(out_size, dtype=np.float64)
    src = (o + 0.5) * (in_size / out_size) - 0.5
    src = np.maximum(src, 0.0)                       # PyTorch clamps negative source coords
    i0 = np.minimum(np.floor(src), in_size - 1).astype(np.int64)
    lam = src - i0
    i1 = np.minimum(i0 + 1, in_size - 1)
    w = np.zeros((out_size, in_size), dtype=np.float64)
    w[np.arange(out_size), i0] += 1.0 - lam
    w[np.arange(out_size), i1] += lam
    return w.astype(np.float32)


def _round_up(x: int, m: int) -> int:
    return ((x + m - 1) // m) * m


def _make_prologue_kernel(real_batch: int, n_deg: int, rp: int, rank: int):
    """BN (batch stats) -> fused upsample/poly factors -> Horner. Runs once."""

    def kernel(x_ref, a_ref, h_ref):
        # x_ref: (Bp, K)        f32, rows >= real_batch are zero padding
        # a_ref: (K, N*Rp)      bf16 fused (upsample @ degree-factor), 128-lane degree blocks
        # h_ref: (Bp, Rp)       bf16 output: [h (R), 1 (beta slot), 0 padding]
        x = x_ref[...]
        bp, k = x.shape
        n_real = float(real_batch * k)

        # BatchNorm2d(1), training-mode batch statistics (gamma=1, beta=0, eps=1e-5).
        # Zero-padded rows add 0 to the sum and a known (bp-b)*k*mean^2 term to the
        # squared-deviation sum, so the stats below are exact for the real batch.
        mean = jnp.sum(x) / n_real
        sqdev = jnp.sum((x - mean) ** 2) - float((bp - real_batch) * k) * mean * mean
        var = sqdev / n_real                          # biased variance, as PyTorch BN uses
        xn = (x - mean) * lax.rsqrt(var + 1e-5)       # f32 elementwise (v5e fast path)

        # Single bf16 MXU matmul over all packed degree factors (f32 accumulate).
        p = jnp.dot(xn.astype(jnp.bfloat16), a_ref[...],
                    preferred_element_type=jnp.float32)          # (Bp, N*Rp) f32

        # Horner-style CCP recurrence on f32; slices are 128-lane aligned.
        h = p[:, :rp]
        for n in range(1, n_deg):
            h = p[:, n * rp:(n + 1) * rp] * h + h

        # Fold the output bias: lane `rank` carries a 1 that multiplies the beta
        # row appended to the projection matrix; padded lanes beyond it stay 0.
        lane = lax.broadcasted_iota(jnp.int32, h.shape, 1)
        h = jnp.where(lane == rank, 1.0, h)
        h_ref[...] = h.astype(jnp.bfloat16)

    return kernel


def _proj_kernel(h_ref, c_ref, o_ref):
    # h_ref: (Bp, Rp)  bf16 resident     c_ref: (Rp, TS) bf16 streamed
    # o_ref: (Bp, TS)  f32 streamed (lane-dense store)
    o_ref[...] = jnp.dot(h_ref[...], c_ref[...], preferred_element_type=jnp.float32)


def _choose_tile_s(s: int, tile_s: int, rp: int, bp: int) -> int:
    # Big tiles (HBM/overhead bound regime), but keep >= 2 tiles when S allows it
    # so v7x's two TensorCores can split the "parallel" S axis.
    half = _round_up(max(1, (s + 1) // 2), 128)
    ts = max(128, min(_round_up(tile_s, 128), half))
    # Keep the double-buffered per-step footprint comfortably under the 32 MiB
    # scoped-VMEM default (v7x has only 64 MiB physical per TensorCore).
    while ts > 512 and 2 * ts * (rp * 2 + bp * 4) > (24 << 20):
        ts //= 2
    return _round_up(ts, 128)


def generator_forward(x, u, c, beta, imwidth, imheight, scalefactor, *, tile_s=16384):
    b, ch, h_in, w_in = x.shape
    assert ch == 1, "Generator uses a single channel (self.c = 1)"
    n_deg, s, rank = u.shape
    k = h_in * w_in
    h_out, w_out = h_in * scalefactor, w_in * scalefactor
    assert s == imwidth * imheight == h_out * w_out

    # --- separable, on-device fusion of the bilinear upsample into the degree
    #     factors: A_n[i,j,r] = sum_{p,q} wh[p,i] ww[q,j] u_n[p,q,r]  (no (K,S) kron) ---
    wh = jnp.asarray(_bilinear_matrix(h_in, h_out))                 # (h_out, h_in)
    ww = jnp.asarray(_bilinear_matrix(w_in, w_out))                 # (w_out, w_in)
    u4 = u.astype(jnp.float32).reshape(n_deg, h_out, w_out, rank)
    t = jnp.einsum('qj,npqr->npjr', ww, u4)                         # contract q first
    a = jnp.einsum('pi,npjr->nijr', wh, t)                          # (N, h_in, w_in, R) f32

    rp = _round_up(rank + 1, 128)                                   # +1 slot for folded beta
    a = a.reshape(n_deg, k, rank)
    a_pad = jnp.zeros((n_deg, k, rp), jnp.float32).at[:, :, :rank].set(a)
    a_packed = jnp.transpose(a_pad, (1, 0, 2)).reshape(k, n_deg * rp).astype(jnp.bfloat16)

    # Pad batch to a multiple of 8 f32 sublanes; padded rows are zero and handled
    # exactly by the kernel BN statistics (K itself is never padded).
    bp = _round_up(max(b, 8), 8)
    x_pad = jnp.zeros((bp, k), jnp.float32).at[:b].set(x.reshape(b, k).astype(jnp.float32))

    # --- prologue pallas_call (runs once): BN + fused factors + Horner -> h_aug ---
    prologue_bytes = bp * k * 4 + k * n_deg * rp * 2 + bp * rp * 2
    h_aug = pl.pallas_call(
        _make_prologue_kernel(b, n_deg, rp, rank),
        out_shape=jax.ShapeDtypeStruct((bp, rp), jnp.bfloat16),
        grid_spec=pltpu.PrefetchScalarGridSpec(
            num_scalar_prefetch=0,
            grid=(1,),
            in_specs=[pl.BlockSpec((bp, k), lambda i: (0, 0)),
                      pl.BlockSpec((k, n_deg * rp), lambda i: (0, 0))],
            out_specs=pl.BlockSpec((bp, rp), lambda i: (0, 0)),
        ),
        compiler_params=pltpu.CompilerParams(
            dimension_semantics=("arbitrary",),
            vmem_limit_bytes=min(max(2 * prologue_bytes + (1 << 20), 16 << 20), 56 << 20),
        ),
        cost_estimate=pl.CostEstimate(
            flops=int(2 * bp * k * n_deg * rp + 6 * bp * k),
            transcendentals=1,
            bytes_accessed=int(prologue_bytes),
        ),
    )(x_pad, a_packed)

    # --- main streamed projection: out tile = h_aug @ c_aug tile (beta folded in) ---
    ts = _choose_tile_s(s, int(tile_s), rp, bp)
    s_pad = _round_up(s, ts)
    n_tiles = s_pad // ts

    c_aug = jnp.zeros((rp, s_pad), jnp.float32)
    c_aug = c_aug.at[:rank, :s].set(c.astype(jnp.float32))
    c_aug = c_aug.at[rank, :s].set(beta.reshape(-1).astype(jnp.float32))
    c_aug = c_aug.astype(jnp.bfloat16)                              # (Rp, S_pad) bf16

    main_step_bytes = rp * ts * 2 + bp * ts * 4
    out_pad = pl.pallas_call(
        _proj_kernel,
        out_shape=jax.ShapeDtypeStruct((bp, s_pad), jnp.float32),
        grid_spec=pltpu.PrefetchScalarGridSpec(
            num_scalar_prefetch=0,
            grid=(n_tiles,),
            in_specs=[
                pl.BlockSpec((bp, rp), lambda j: (0, 0)),           # h_aug (resident)
                pl.BlockSpec((rp, ts), lambda j: (0, j)),           # c_aug tile (streamed)
            ],
            out_specs=pl.BlockSpec((bp, ts), lambda j: (0, j)),     # lane-dense output tile
        ),
        compiler_params=pltpu.CompilerParams(
            dimension_semantics=("parallel",),                      # v7x: 2 TCs split S tiles
            vmem_limit_bytes=min(max(2 * main_step_bytes + bp * rp * 2 + (1 << 20), 16 << 20),
                                 56 << 20),
        ),
        cost_estimate=pl.CostEstimate(
            flops=int(2 * bp * rp * s_pad),
            transcendentals=0,
            bytes_accessed=int(rp * s_pad * 2 + bp * s_pad * 4 + bp * rp * 2),
        ),
    )(h_aug, c_aug)

    # matches the reference: self.x.reshape(batch_size, self.c, imwidth, imheight)
    return out_pad[:b, :s].reshape(b, 1, imwidth, imheight)


if __name__ == "__main__":
    # Small shapes consistent with the module (batch divisible by workers=4).
    B, C = 4, 1
    IMW = IMH = 32             # generator output resolution (imwidth, imheight)
    SF = 2                     # scalefactor -> input spatial = 16 x 16
    H_IN, W_IN = IMH // SF, IMW // SF
    N_DEG, RANK = 3, 32        # PolyLayer (N, rank)
    S = IMW * IMH

    key = jax.random.PRNGKey(0)
    kx, ku, kc, kb = jax.random.split(key, 4)
    x = jax.random.normal(kx, (B, C, H_IN, W_IN), dtype=jnp.float32)

    # TODO(synk): `layer` (PolyLayer) is an injected, undefined class in the reference
    # module; a deterministic degree-N, rank-R CCP polynomial layer on the flattened
    # s-vector is substituted here (the threading/queue plumbing has no numeric effect).
    u = jax.random.normal(ku, (N_DEG, S, RANK), dtype=jnp.float32) * 0.05
    c = jax.random.normal(kc, (RANK, S), dtype=jnp.float32) * 0.05
    beta = jax.random.normal(kb, (1, S), dtype=jnp.float32) * 0.01

    out = generator_forward(x, u, c, beta, IMW, IMH, SF)
    out = jax.block_until_ready(out)

    # Pure-f32 JAX reference of the original (unfused) math.
    wh = _bilinear_matrix(H_IN, IMH)
    ww = _bilinear_matrix(W_IN, IMW)
    wup_t = jnp.asarray(np.kron(wh, ww).T)           # (H_IN*W_IN, S) -- small test shape only
    xf = x.reshape(B, H_IN * W_IN)
    mean = jnp.mean(xf)
    var = jnp.mean((xf - mean) ** 2)
    xn = (xf - mean) * lax.rsqrt(var + 1e-5)
    z = xn @ wup_t
    h = z @ u[0]
    for n in range(1, N_DEG):
        h = (z @ u[n]) * h + h
    ref = (h @ c + beta).reshape(B, 1, IMW, IMH)

    assert out.shape == (B, C, IMW, IMH)
    # Kernel uses bf16 MXU operands with f32 accumulation -> bf16-level tolerance
    # against the pure-f32 reference.
    np.testing.assert_allclose(np.asarray(out), np.asarray(ref), rtol=2e-2, atol=2e-2)
    print("KERNEL_OK")
</pallas_src>

<mosaic_0001>
module attributes {stable_mosaic.version = 11 : i64} {
  func.func @kernel(%arg0: i32, %arg1: memref<8x256xf32, #tpu.memory_space<vmem>>, %arg2: memref<256x384xbf16, #tpu.memory_space<vmem>>, %arg3: memref<8x128xbf16, #tpu.memory_space<vmem>>) attributes {dimension_semantics = [#tpu.dimension_semantics<arbitrary>], iteration_bounds = array<i64: 1>, scalar_prefetch = 0 : i64, scratch_operands = 0 : i64, tpu.core_type = #tpu.core_type<tc>, window_params = [{pipeline_mode = #tpu.pipeline_mode<synchronous>, transform_indices = @transform_0, window_bounds = array<i64: 8, 256>}, {pipeline_mode = #tpu.pipeline_mode<synchronous>, transform_indices = @transform_1, window_bounds = array<i64: 256, 384>}, {pipeline_mode = #tpu.pipeline_mode<synchronous>, transform_indices = @transform_2, window_bounds = array<i64: 8, 128>}]} {
    %c0 = arith.constant 0 : index
    %c0_0 = arith.constant 0 : index
    %0 = vector.load %arg1[%c0, %c0_0] : memref<8x256xf32, #tpu.memory_space<vmem>>, vector<8x256xf32>
    %1 = vector.shape_cast %0 : vector<8x256xf32> to vector<1x8x256xf32>
    %cst = arith.constant dense<0.000000e+00> : vector<1xf32>
    %2 = vector.multi_reduction <add>, %1, %cst [1, 2] : vector<1x8x256xf32> to vector<1xf32>
    %3 = vector.shape_cast %2 : vector<1xf32> to vector<1x1x1xf32>
    %4 = vector.extract %3[0, 0, 0] : f32 from vector<1x1x1xf32>
    %cst_1 = arith.constant 1.024000e+03 : f32
    %5 = arith.divf %4, %cst_1 : f32
    %6 = vector.broadcast %5 : f32 to vector<8x256xf32>
    %7 = arith.subf %0, %6 : vector<8x256xf32>
    %8 = arith.mulf %7, %7 : vector<8x256xf32>
    %9 = vector.shape_cast %8 : vector<8x256xf32> to vector<1x8x256xf32>
    %cst_2 = arith.constant dense<0.000000e+00> : vector<1xf32>
    %10 = vector.multi_reduction <add>, %9, %cst_2 [1, 2] : vector<1x8x256xf32> to vector<1xf32>
    %11 = vector.shape_cast %10 : vector<1xf32> to vector<1x1x1xf32>
    %12 = vector.extract %11[0, 0, 0] : f32 from vector<1x1x1xf32>
    %cst_3 = arith.constant 1.024000e+03 : f32
    %13 = arith.mulf %cst_3, %5 : f32
    %14 = arith.mulf %13, %5 : f32
    %15 = arith.subf %12, %14 : f32
    %cst_4 = arith.constant 1.024000e+03 : f32
    %16 = arith.divf %15, %cst_4 : f32
    %17 = vector.broadcast %5 : f32 to vector<8x256xf32>
    %18 = arith.subf %0, %17 : vector<8x256xf32>
    %cst_5 = arith.constant 9.99999974E-6 : f32
    %19 = arith.addf %16, %cst_5 : f32
    %20 = math.rsqrt %19 : f32
    %21 = vector.broadcast %20 : f32 to vector<8x256xf32>
    %22 = arith.mulf %18, %21 : vector<8x256xf32>
    %23 = arith.truncf %22 : vector<8x256xf32> to vector<8x256xbf16>
    %c0_6 = arith.constant 0 : index
    %c0_7 = arith.constant 0 : index
    %24 = vector.load %arg2[%c0_6, %c0_7] : memref<256x384xbf16, #tpu.memory_space<vmem>>, vector<256x384xbf16>
    %cst_8 = arith.constant dense<0.000000e+00> : vector<8x384xf32>
    %25 = tpu.matmul %23, %24, %cst_8 {dimension_numbers = #tpu.dot_dimension_numbers<[1], [0], [0], [1], [0, 0, 1, 1], [], []>} : vector<8x256xbf16>, vector<256x384xbf16>, vector<8x384xf32> -> vector<8x384xf32>
    %26 = vector.extract_strided_slice %25 {offsets = [0, 0], sizes = [8, 128], strides = [1, 1]} : vector<8x384xf32> to vector<8x128xf32>
    %27 = vector.extract_strided_slice %25 {offsets = [0, 128], sizes = [8, 128], strides = [1, 1]} : vector<8x384xf32> to vector<8x128xf32>
    %28 = arith.mulf %27, %26 : vector<8x128xf32>
    %29 = arith.addf %28, %26 : vector<8x128xf32>
    %30 = vector.extract_strided_slice %25 {offsets = [0, 256], sizes = [8, 128], strides = [1, 1]} : vector<8x384xf32> to vector<8x128xf32>
    %31 = arith.mulf %30, %29 : vector<8x128xf32>
    %32 = arith.addf %31, %29 : vector<8x128xf32>
    %33 = tpu.iota {dimensions = array<i32: 1>} : vector<8x128xi32>
    %c32_i32 = arith.constant 32 : i32
    %34 = vector.broadcast %c32_i32 : i32 to vector<8x128xi32>
    %35 = arith.cmpi eq, %33, %34 : vector<8x128xi32>
    %cst_9 = arith.constant 1.000000e+00 : f32
    %36 = vector.broadcast %cst_9 : f32 to vector<8x128xf32>
    %37 = arith.select %35, %36, %32 : vector<8x128xi1>, vector<8x128xf32>
    %38 = arith.truncf %37 : vector<8x128xf32> to vector<8x128xbf16>
    %c0_10 = arith.constant 0 : index
    %c0_11 = arith.constant 0 : index
    %39 = vector.load %arg3[%c0_10, %c0_11] : memref<8x128xbf16, #tpu.memory_space<vmem>>, vector<8x128xbf16>
    tpu.vector_store %arg3[%c0_10, %c0_11], %38 {strides = array<i32>} : memref<8x128xbf16, #tpu.memory_space<vmem>>, vector<8x128xbf16>,
    return
  }
  func.func @transform_0(%arg0: i32) -> (i32, i32) {
    %c0_i32 = arith.constant 0 : i32
    %c0_i32_0 = arith.constant 0 : i32
    %c0_i32_1 = arith.constant 0 : i32
    return %c0_i32, %c0_i32_0 : i32, i32
  }
  func.func @transform_1(%arg0: i32) -> (i32, i32) {
    %c0_i32 = arith.constant 0 : i32
    %c0_i32_0 = arith.constant 0 : i32
    %c0_i32_1 = arith.constant 0 : i32
    return %c0_i32, %c0_i32_0 : i32, i32
  }
  func.func @transform_2(%arg0: i32) -> (i32, i32) {
    %c0_i32 = arith.constant 0 : i32
    %c0_i32_0 = arith.constant 0 : i32
    %c0_i32_1 = arith.constant 0 : i32
    return %c0_i32, %c0_i32_0 : i32, i32
  }
}

</mosaic_0001>

<llo_original>
// kernel: tpu_custom_call.1
$region0: #{tpu_custom_call.1}
  #allocation0 [shape = 'u32[]', space=smem, size = 0x4, offset = 0x4, fixed_abs, tag = 'smem constant byte address 0x4 - core index']
  #allocation1 [shape = 'u32[144,128]{1,0:T(1,128)}', space=vmem, size = 0x12000, scoped, tag = 'internal scratch']
  %s0 = inlined_call_operand.hbm [shape: f32[8,256], index: 0, kind: input, shape index: {}]
  %s1 = inlined_call_operand.hbm [shape: bf16[256,384], index: 1, kind: input, shape index: {}]
  %s2 = inlined_call_operand.hbm [shape: bf16[8,128], index: 2, kind: output, shape index: {}]
  %s3 = sld [smem:[#allocation0]]
  $region26: #{tpu_custom_call.1} parent=0
    _
  %s5 = ssub.s32 1, %s3
  %s6 = scalar_select 0, %s5, %s3
  $region1: #{tpu_custom_call.1} parent=0
    #allocation2 [shape = 'u8[8192]{0}', space=vmem, size = 0x2000, scoped, tag = 'input window, operand 0, single buffered']
    #allocation3 [shape = 's32[1]{0}', space=sflag, size = 0x4, scoped, tag = 'scoped memory for tpu_custom_call.1']
    #allocation4 [shape = 's32[1]{0}', space=sflag, size = 0x4, scoped, tag = 'scoped memory for tpu_custom_call.1']
    #allocation5 [shape = 'u8[196608]{0}', space=vmem, size = 0x30000, scoped, tag = 'input window, operand 1, single buffered']
    #allocation6 [shape = 's32[1]{0}', space=sflag, size = 0x4, scoped, tag = 'scoped memory for tpu_custom_call.1']
    #allocation7 [shape = 'u8[2048]{0}', space=vmem, size = 0x800, scoped, tag = 'output window, operand 0, single buffered']
    %7 = vsyncpa [#allocation3], 0
    %8 = vsyncpa [#allocation6], 0
    %9 = vsyncpa [#allocation4], 0
    // Predicated region
    $region2: #{tpu_custom_call.1} parent=1 // pred_check
      _
    $region3: #{tpu_custom_call.1} parent=1 // pred_check_branch
      %11 = sbr.rel (0) target = $region5
    $region4: #{tpu_custom_call.1} parent=1 // pred_region
      %s13 = ssub.s32 256, 256
      %14 = vsyncadd [#allocation3], %s13
      %s16 = sshll.u32 [#allocation2], 4
      %s17 = int_to_ptr.vmem [resolvable:$true] %s16
      %19 = dma.hbm_to_vmem [thread:$0]  %s0, 256, %s17, [#allocation3]
    $region5: #{tpu_custom_call.1} parent=1 // pred_fallthru
      _
    // Predicated region
    $region6: #{tpu_custom_call.1} parent=1 // pred_check
      _
    $region7: #{tpu_custom_call.1} parent=1 // pred_check_branch
      %21 = sbr.rel (0) target = $region9
    $region8: #{tpu_custom_call.1} parent=1 // pred_region
      %s23 = ssub.s32 6144, 6144
      %24 = vsyncadd [#allocation6], %s23
      %s25 = sshll.u32 [#allocation5], 4
      %s26 = int_to_ptr.vmem [resolvable:$true] %s25
      %31 = dma.hbm_to_vmem [thread:$0]  %s1, 6144, %s26, [#allocation6], 192, 192, 12
    $region9: #{tpu_custom_call.1} parent=1 // pred_fallthru
      _
    // Predicated region
    $region10: #{tpu_custom_call.1} parent=1 // pred_check
      _
    $region11: #{tpu_custom_call.1} parent=1 // pred_check_branch
      %33 = sbr.rel (0) target = $region13
    $region12: #{tpu_custom_call.1} parent=1 // pred_region
      %34 = dma.done [#allocation3], 256
    $region13: #{tpu_custom_call.1} parent=1 // pred_fallthru
      _
    // Predicated region
    $region14: #{tpu_custom_call.1} parent=1 // pred_check
      _
    $region15: #{tpu_custom_call.1} parent=1 // pred_check_branch
      %36 = sbr.rel (0) target = $region17
    $region16: #{tpu_custom_call.1} parent=1 // pred_region
      %37 = dma.done [#allocation6], 6144
    $region17: #{tpu_custom_call.1} parent=1 // pred_fallthru
      _
    %v39 = vld [vmem:[#allocation2] sm:$0xff]
    %v40 = vld [vmem:[#allocation2 + $0x8] sm:$0xff]
    %v41 = vadd.f32 %v39, %v40
    %42 = vadd.xlane.f32.xlu0 %v41
    %v43 = vpop.xlane.xlu0 %42
    %v44 = vrot.slane %v43, 4
    %v45 = vadd.f32 %v43, %v44
    %v46 = vrot.slane %v45, 2
    %v47 = vadd.f32 %v45, %v46
    %v48 = vrot.slane %v47, 1
    %v49 = vadd.f32 %v47, %v48
    %s50 = vtos %v49
    %v51 = vrcp.pop 1024.0
    %s52 = vtos %v51
    %s53 = smul.f32 %s50, %s52
    %v54 = vstv %s53
    %v55 = vsub.f32 %v39, %v54
    %v56 = vsub.f32 %v40, %v54
    %v57 = vmul.f32 %v55, %v55
    %v58 = vmul.f32 %v56, %v56
    %v59 = vadd.f32 %v57, %v58
    %60 = vadd.xlane.f32.xlu0 %v59
    %v61 = vpop.xlane.xlu0 %60
    %v62 = vrot.slane %v61, 4
    %v63 = vadd.f32 %v61, %v62
    %v64 = vrot.slane %v63, 2
    %v65 = vadd.f32 %v63, %v64
    %v66 = vrot.slane %v65, 1
    %v67 = vadd.f32 %v65, %v66
    %s68 = vtos %v67
    %s69 = smul.f32 %s53, 1024.0
    %s70 = smul.f32 %s69, %s53
    %s71 = ssub.f32 %s68, %s70
    %v72 = vrcp.pop 1024.0
    %s73 = vtos %v72
    %s74 = smul.f32 %s71, %s73
    %s75 = sadd.f32 %s74, 1e-05
    %v76 = vstv %s75
    %v77 = vrsqrt.pop %v76
    %s78 = vtos %v77
    %v79 = vstv %s78
    %v80 = vmul.f32 %v55, %v79
    %v81 = vmul.f32 %v56, %v79
    %v82 = vpack.c.bf16 %v80, %v80
    %v83 = vpack.c.bf16 %v81, %v81
    %v84 = vld [vmem:[#allocation5] sm:$0xff]
    %v85 = vld [vmem:[#allocation5 + $0x8] sm:$0xf]
    %v86 = vld [vmem:[#allocation5 + $0xc] sm:$0xff]
    %v87 = vld [vmem:[#allocation5 + $0x14] sm:$0xf]
    %v88 = vld [vmem:[#allocation5 + $0x18] sm:$0xff]
    %v89 = vld [vmem:[#allocation5 + $0x20] sm:$0xf]
    %v90 = vld [vmem:[#allocation5 + $0x24] sm:$0xff]
    %v91 = vld [vmem:[#allocation5 + $0x2c] sm:$0xf]
    %v92 = vld [vmem:[#allocation5 + $0x30] sm:$0xff]
    %v93 = vld [vmem:[#allocation5 + $0x38] sm:$0xf]
    %v94 = vld [vmem:[#allocation5 + $0x3c] sm:$0xff]
    %v95 = vld [vmem:[#allocation5 + $0x44] sm:$0xf]
    %v96 = vld [vmem:[#allocation5 + $0x48] sm:$0xff]
    %v97 = vld [vmem:[#allocation5 + $0x50] sm:$0xf]
    %v98 = vld [vmem:[#allocation5 + $0x54] sm:$0xff]
    %v99 = vld [vmem:[#allocation5 + $0x5c] sm:$0xf]
    %v100 = vld [vmem:[#allocation5 + $0x60] sm:$0xff]
    %v101 = vld [vmem:[#allocation5 + $0x68] sm:$0xf]
    %v102 = vld [vmem:[#allocation5 + $0x6c] sm:$0xff]
    %v103 = vld [vmem:[#allocation5 + $0x74] sm:$0xf]
    %v104 = vld [vmem:[#allocation5 + $0x78] sm:$0xff]
    %v105 = vld [vmem:[#allocation5 + $0x80] sm:$0xf]
    %v106 = vld [vmem:[#allocation5 + $0x84] sm:$0xff]
    %v107 = vld [vmem:[#allocation5 + $0x8c] sm:$0xf]
    %v108 = vld [vmem:[#allocation5 + $0x90] sm:$0xff]
    %v109 = vld [vmem:[#allocation5 + $0x98] sm:$0xf]
    %v110 = vld [vmem:[#allocation5 + $0x9c] sm:$0xff]
    %v111 = vld [vmem:[#allocation5 + $0xa4] sm:$0xf]
    %v112 = vld [vmem:[#allocation5 + $0xa8] sm:$0xff]
    %v113 = vld [vmem:[#allocation5 + $0xb0] sm:$0xf]
    %v114 = vld [vmem:[#allocation5 + $0xb4] sm:$0xff]
    %v115 = vld [vmem:[#allocation5 + $0xbc] sm:$0xf]
    %v116 = vld [vmem:[#allocation5 + $0xc0] sm:$0xff]
    %v117 = vld [vmem:[#allocation5 + $0xc8] sm:$0xf]
    %v118 = vld [vmem:[#allocation5 + $0xcc] sm:$0xff]
    %v119 = vld [vmem:[#allocation5 + $0xd4] sm:$0xf]
    %v120 = vld [vmem:[#allocation5 + $0xd8] sm:$0xff]
    %v121 = vld [vmem:[#allocation5 + $0xe0] sm:$0xf]
    %v122 = vld [vmem:[#allocation5 + $0xe4] sm:$0xff]
    %v123 = vld [vmem:[#allocation5 + $0xec] sm:$0xf]
    %v124 = vld [vmem:[#allocation5 + $0xf0] sm:$0xff]
    %v125 = vld [vmem:[#allocation5 + $0xf8] sm:$0xf]
    %v126 = vld [vmem:[#allocation5 + $0xfc] sm:$0xff]
    %v127 = vld [vmem:[#allocation5 + $0x104] sm:$0xf]
    %v128 = vld [vmem:[#allocation5 + $0x108] sm:$0xff]
    %v129 = vld [vmem:[#allocation5 + $0x110] sm:$0xf]
    %v130 = vld [vmem:[#allocation5 + $0x114] sm:$0xff]
    %v131 = vld [vmem:[#allocation5 + $0x11c] sm:$0xf]
    %v132 = vld [vmem:[#allocation5 + $0x120] sm:$0xff]
    %v133 = vld [vmem:[#allocation5 + $0x128] sm:$0xf]
    %v134 = vld [vmem:[#allocation5 + $0x12c] sm:$0xff]
    %v135 = vld [vmem:[#allocation5 + $0x134] sm:$0xf]
    %v136 = vld [vmem:[#allocation5 + $0x138] sm:$0xff]
    %v137 = vld [vmem:[#allocation5 + $0x140] sm:$0xf]
    %v138 = vld [vmem:[#allocation5 + $0x144] sm:$0xff]
    %v139 = vld [vmem:[#allocation5 + $0x14c] sm:$0xf]
    %v140 = vld [vmem:[#allocation5 + $0x150] sm:$0xff]
    %v141 = vld [vmem:[#allocation5 + $0x158] sm:$0xf]
    %v142 = vld [vmem:[#allocation5 + $0x15c] sm:$0xff]
    %v143 = vld [vmem:[#allocation5 + $0x164] sm:$0xf]
    %v144 = vld [vmem:[#allocation5 + $0x168] sm:$0xff]
    %v145 = vld [vmem:[#allocation5 + $0x170] sm:$0xf]
    %v146 = vld [vmem:[#allocation5 + $0x174] sm:$0xff]
    %v147 = vld [vmem:[#allocation5 + $0x17c] sm:$0xf]
    %v212 = vunpack.c.l.b16 %v84
    %v213 = vunpack.c.h.b16 %v84
    %v214 = vunpack.c.l.b16 %v85
    %v215 = vunpack.c.l.b16 %v86
    %v216 = vunpack.c.h.b16 %v86
    %v217 = vunpack.c.l.b16 %v87
    %v218 = vunpack.c.l.b16 %v88
    %v219 = vunpack.c.h.b16 %v88
    %v220 = vunpack.c.l.b16 %v89
    %v221 = vunpack.c.l.b16 %v90
    %v222 = vunpack.c.h.b16 %v90
    %v223 = vunpack.c.l.b16 %v91
    %v224 = vunpack.c.l.b16 %v92
    %v225 = vunpack.c.h.b16 %v92
    %v226 = vunpack.c.l.b16 %v93
    %v227 = vunpack.c.l.b16 %v94
    %v228 = vunpack.c.h.b16 %v94
    %v229 = vunpack.c.l.b16 %v95
    %v230 = vunpack.c.l.b16 %v96
    %v231 = vunpack.c.h.b16 %v96
    %v232 = vunpack.c.l.b16 %v97
    %v233 = vunpack.c.l.b16 %v98
    %v234 = vunpack.c.h.b16 %v98
    %v235 = vunpack.c.l.b16 %v99
    %v236 = vunpack.c.l.b16 %v100
    %v237 = vunpack.c.h.b16 %v100
    %v238 = vunpack.c.l.b16 %v101
    %v239 = vunpack.c.l.b16 %v102
    %v240 = vunpack.c.h.b16 %v102
    %v241 = vunpack.c.l.b16 %v103
    %v242 = vunpack.c.l.b16 %v104
    %v243 = vunpack.c.h.b16 %v104
    %v244 = vunpack.c.l.b16 %v105
    %v245 = vunpack.c.l.b16 %v106
    %v246 = vunpack.c.h.b16 %v106
    %v247 = vunpack.c.l.b16 %v107
    %v248 = vunpack.c.l.b16 %v108
    %v249 = vunpack.c.h.b16 %v108
    %v250 = vunpack.c.l.b16 %v109
    %v251 = vunpack.c.l.b16 %v110
    %v252 = vunpack.c.h.b16 %v110
    %v253 = vunpack.c.l.b16 %v111
    %v254 = vunpack.c.l.b16 %v112
    %v255 = vunpack.c.h.b16 %v112
    %v256 = vunpack.c.l.b16 %v113
    %v257 = vunpack.c.l.b16 %v114
    %v258 = vunpack.c.h.b16 %v114
    %v259 = vunpack.c.l.b16 %v115
    %v260 = vunpack.c.l.b16 %v116
    %v261 = vunpack.c.h.b16 %v116
    %v262 = vunpack.c.l.b16 %v117
    %v263 = vunpack.c.l.b16 %v118
    %v264 = vunpack.c.h.b16 %v118
    %v265 = vunpack.c.l.b16 %v119
    %v266 = vunpack.c.l.b16 %v120
    %v267 = vunpack.c.h.b16 %v120
    %v268 = vunpack.c.l.b16 %v121
    %v269 = vunpack.c.l.b16 %v122
    %v270 = vunpack.c.h.b16 %v122
    %v271 = vunpack.c.l.b16 %v123
    %v272 = vunpack.c.l.b16 %v124
    %v273 = vunpack.c.h.b16 %v124
    %v274 = vunpack.c.l.b16 %v125
    %v275 = vunpack.c.l.b16 %v126
    %v276 = vunpack.c.h.b16 %v126
    %v277 = vunpack.c.l.b16 %v127
    %v278 = vunpack.c.l.b16 %v128
    %v279 = vunpack.c.h.b16 %v128
    %v280 = vunpack.c.l.b16 %v129
    %v281 = vunpack.c.l.b16 %v130
    %v282 = vunpack.c.h.b16 %v130
    %v283 = vunpack.c.l.b16 %v131
    %v284 = vunpack.c.l.b16 %v132
    %v285 = vunpack.c.h.b16 %v132
    %v286 = vunpack.c.l.b16 %v133
    %v287 = vunpack.c.l.b16 %v134
    %v288 = vunpack.c.h.b16 %v134
    %v289 = vunpack.c.l.b16 %v135
    %v290 = vunpack.c.l.b16 %v136
    %v291 = vunpack.c.h.b16 %v136
    %v292 = vunpack.c.l.b16 %v137
    %v293 = vunpack.c.l.b16 %v138
    %v294 = vunpack.c.h.b16 %v138
    %v295 = vunpack.c.l.b16 %v139
    %v296 = vunpack.c.l.b16 %v140
    %v297 = vunpack.c.h.b16 %v140
    %v298 = vunpack.c.l.b16 %v141
    %v299 = vunpack.c.l.b16 %v142
    %v300 = vunpack.c.h.b16 %v142
    %v301 = vunpack.c.l.b16 %v143
    %v302 = vunpack.c.l.b16 %v144
    %v303 = vunpack.c.h.b16 %v144
    %v304 = vunpack.c.l.b16 %v145
    %v305 = vunpack.c.l.b16 %v146
    %v306 = vunpack.c.h.b16 %v146
    %v307 = vunpack.c.l.b16 %v147
    %v308 = vpack.c.b16 %v215, %v212
    %v309 = vpack.c.b16 %v216, %v213
    %v310 = vpack.c.b16 %v217, %v214
    %v311 = vpack.c.b16 %v221, %v218
    %v312 = vpack.c.b16 %v222, %v219
    %v313 = vpack.c.b16 %v223, %v220
    %v314 = vpack.c.b16 %v227, %v224
    %v315 = vpack.c.b16 %v228, %v225
    %v316 = vpack.c.b16 %v229, %v226
    %v317 = vpack.c.b16 %v233, %v230
    %v318 = vpack.c.b16 %v234, %v231
    %v319 = vpack.c.b16 %v235, %v232
    %v320 = vpack.c.b16 %v239, %v236
    %v321 = vpack.c.b16 %v240, %v237
    %v322 = vpack.c.b16 %v241, %v238
    %v323 = vpack.c.b16 %v245, %v242
    %v324 = vpack.c.b16 %v246, %v243
    %v325 = vpack.c.b16 %v247, %v244
    %v326 = vpack.c.b16 %v251, %v248
    %v327 = vpack.c.b16 %v252, %v249
    %v328 = vpack.c.b16 %v253, %v250
    %v329 = vpack.c.b16 %v257, %v254
    %v330 = vpack.c.b16 %v258, %v255
    %v331 = vpack.c.b16 %v259, %v256
    %v332 = vpack.c.b16 %v263, %v260
    %v333 = vpack.c.b16 %v264, %v261
    %v334 = vpack.c.b16 %v265, %v262
    %v335 = vpack.c.b16 %v269, %v266
    %v336 = vpack.c.b16 %v270, %v267
    %v337 = vpack.c.b16 %v271, %v268
    %v338 = vpack.c.b16 %v275, %v272
    %v339 = vpack.c.b16 %v276, %v273
    %v340 = vpack.c.b16 %v277, %v274
    %v341 = vpack.c.b16 %v281, %v278
    %v342 = vpack.c.b16 %v282, %v279
    %v343 = vpack.c.b16 %v283, %v280
    %v344 = vpack.c.b16 %v287, %v284
    %v345 = vpack.c.b16 %v288, %v285
    %v346 = vpack.c.b16 %v289, %v286
    %v347 = vpack.c.b16 %v293, %v290
    %v348 = vpack.c.b16 %v294, %v291
    %v349 = vpack.c.b16 %v295, %v292
    %v350 = vpack.c.b16 %v299, %v296
    %v351 = vpack.c.b16 %v300, %v297
    %v352 = vpack.c.b16 %v301, %v298
    %v353 = vpack.c.b16 %v305, %v302
    %v354 = vpack.c.b16 %v306, %v303
    %v355 = vpack.c.b16 %v307, %v304
    %404 = vmatprep.subr.bf16.mxu0 %v309
    %405 = vmatpush1.bf16.msra.mxu0 %v308
    %406 = vmatprep.subr.bf16.mxu0 %v312
    %407 = vmatpush1.bf16.msra.mxu0 %v311
    %408 = vmatprep.subr.bf16.mxu0 %v315
    %409 = vmatpush1.bf16.msra.mxu0 %v314
    %410 = vmatprep.subr.bf16.mxu0 %v318
    %411 = vmatpush1.bf16.msra.mxu0 %v317
    %412 = vmatprep.subr.bf16.mxu0 %v321
    %413 = vmatpush1.bf16.msra.mxu0 %v320
    %414 = vmatprep.subr.bf16.mxu0 %v324
    %415 = vmatpush1.bf16.msra.mxu0 %v323
    %416 = vmatprep.subr.bf16.mxu0 %v327
    %417 = vmatpush1.bf16.msra.mxu0 %v326
    %418 = vmatprep.subr.bf16.mxu0 %v330
    %419 = vmatpush1.bf16.msra.mxu0 %v329
    %420 = vmatprep.subr.bf16.mxu0 %v333
    %421 = vmatpush1.bf16.msra.mxu0 %v332
    %422 = vmatprep.subr.bf16.mxu0 %v336
    %423 = vmatpush1.bf16.msra.mxu0 %v335
    %424 = vmatprep.subr.bf16.mxu0 %v339
    %425 = vmatpush1.bf16.msra.mxu0 %v338
    %426 = vmatprep.subr.bf16.mxu0 %v342
    %427 = vmatpush1.bf16.msra.mxu0 %v341
    %428 = vmatprep.subr.bf16.mxu0 %v345
    %429 = vmatpush1.bf16.msra.mxu0 %v344
    %430 = vmatprep.subr.bf16.mxu0 %v348
    %431 = vmatpush1.bf16.msra.mxu0 %v347
    %432 = vmatprep.subr.bf16.mxu0 %v351
    %433 = vmatpush1.bf16.msra.mxu0 %v350
    %434 = vmatprep.subr.bf16.mxu0 %v354
    %435 = vmatpush1.bf16.msra.mxu0 %v353
    %436 = vmatprep.mubr.bf16.mxu0 %v83
    %437 = vmatmul.mubr.bf16.gmra.mrb[0].mxu0 %v82
    %v438 = vpop.f32.mrb[0].mxu0
    %v439 = vadd.f32 0.0, %v438
    %v440 = vpop.f32.mrb[0].mxu0
    %v441 = vadd.f32 0.0, %v440
    %v442 = vpop.f32.mrb[0].mxu0
    %v443 = vpop.f32.mrb[0].mxu0
    %444 = vdwg.mxu0
    %445 = vmatprep.subr.bf16.mxu0 0
    %446 = vmatpush1.bf16.msra.mxu0 %v310
    %447 = vmatprep.subr.bf16.mxu0 0
    %448 = vmatpush1.bf16.msra.mxu0 %v313
    %449 = vmatprep.subr.bf16.mxu0 0
    %450 = vmatpush1.bf16.msra.mxu0 %v316
    %451 = vmatprep.subr.bf16.mxu0 0
    %452 = vmatpush1.bf16.msra.mxu0 %v319
    %453 = vmatprep.subr.bf16.mxu0 0
    %454 = vmatpush1.bf16.msra.mxu0 %v322
    %455 = vmatprep.subr.bf16.mxu0 0
    %456 = vmatpush1.bf16.msra.mxu0 %v325
    %457 = vmatprep.subr.bf16.mxu0 0
    %458 = vmatpush1.bf16.msra.mxu0 %v328
    %459 = vmatprep.subr.bf16.mxu0 0
    %460 = vmatpush1.bf16.msra.mxu0 %v331
    %461 = vmatprep.subr.bf16.mxu0 0
    %462 = vmatpush1.bf16.msra.mxu0 %v334
    %463 = vmatprep.subr.bf16.mxu0 0
    %464 = vmatpush1.bf16.msra.mxu0 %v337
    %465 = vmatprep.subr.bf16.mxu0 0
    %466 = vmatpush1.bf16.msra.mxu0 %v340
    %467 = vmatprep.subr.bf16.mxu0 0
    %468 = vmatpush1.bf16.msra.mxu0 %v343
    %469 = vmatprep.subr.bf16.mxu0 0
    %470 = vmatpush1.bf16.msra.mxu0 %v346
    %471 = vmatprep.subr.bf16.mxu0 0
    %472 = vmatpush1.bf16.msra.mxu0 %v349
    %473 = vmatprep.subr.bf16.mxu0 0
    %474 = vmatpush1.bf16.msra.mxu0 %v352
    %475 = vmatprep.subr.bf16.mxu0 0
    %476 = vmatpush1.bf16.msra.mxu0 %v355
    %477 = vmatprep.mubr.bf16.mxu0 %v83
    %478 = vmatmul.mubr.bf16.gmra.mrb[0].mxu0 %v82
    %v479 = vpop.f32.mrb[0].mxu0
    %v480 = vadd.f32 0.0, %v479
    %v481 = vpop.f32.mrb[0].mxu0
    %v482 = vpop.f32.mrb[0].mxu0
    %v483 = vpop.f32.mrb[0].mxu0
    %484 = vdwg.mxu0
    %v485 = vmul.f32 %v441, %v439
    %v486 = vadd.f32 %v485, %v439
    %v487 = vmul.f32 %v480, %v486
    %v488 = vadd.f32 %v487, %v486
    %v489 = vlaneseq
    %v490 = vand.u32 %v489, 127
    %vm491 = vcmp.eq.s32.totalorder %v490, 32
    %v492 = vsel %vm491, 1.0, %v488
    %v493 = vpack.c.bf16 %v492, %v492
    %494 = vst [vmem:[#allocation7] sm:$0xf] %v493
    // Predicated region
    $region18: #{tpu_custom_call.1} parent=1 // pred_check
      _
    $region19: #{tpu_custom_call.1} parent=1 // pred_check_branch
      %496 = sbr.rel (0) target = $region21
    $region20: #{tpu_custom_call.1} parent=1 // pred_region
      %s498 = ssub.s32 64, 64
      %499 = vsyncadd [#allocation4], %s498
      %s501 = sshll.u32 [#allocation7], 4
      %s502 = int_to_ptr.vmem [resolvable:$true] %s501
      %504 = dma.vmem_to_hbm [thread:$0]  %s502, 64, %s2, [#allocation4]
    $region21: #{tpu_custom_call.1} parent=1 // pred_fallthru
      _
    // Predicated region
    $region22: #{tpu_custom_call.1} parent=1 // pred_check
      _
    $region23: #{tpu_custom_call.1} parent=1 // pred_check_branch
      %506 = sbr.rel (0) target = $region25
    $region24: #{tpu_custom_call.1} parent=1 // pred_region
      %507 = dma.done [#allocation4], 64
    $region25: #{tpu_custom_call.1} parent=1 // pred_fallthru
      _
    %508 = vsyncpa [#allocation3], 1
    %509 = vsyncpa [#allocation6], 1
    %510 = vsyncpa [#allocation4], 1

</llo_original>
